<compile_context>
chip_gen: v5e
topology: v5e:2x2
jax: 0.10.0
libtpu: 0.0.40
codegen_flags: <defaults>
</compile_context>

<pallas_src>
import jax
import jax.numpy as jnp
from jax.experimental import pallas as pl
from jax.experimental.pallas import tpu as pltpu


def _linear_clamp_kernel(bounds_ref, x_ref, w_ref, b_ref, o_ref):
    # bounds_ref: SMEM f32[2] = [min_value, max_value]
    # x_ref: (TB, IN) VMEM batch tile
    # w_ref: (IN, OUT) VMEM-resident weights
    # b_ref: (1, OUT)  VMEM-resident bias
    y = jnp.dot(x_ref[...], w_ref[...],
                preferred_element_type=jnp.float32)      # MXU: (TB, OUT)
    y = y + b_ref[...]                                   # bias broadcast
    lo = bounds_ref[0]                                   # torch.clamp_min
    hi = bounds_ref[1]                                   # torch.clamp_max
    o_ref[...] = jnp.clip(y, lo, hi).astype(o_ref.dtype)


def _choose_tile(B, tile_b):
    """Pick the batch-tile size.

    - Tiny batches: one full-array block (legal since it equals the array dim).
    - Otherwise: at least 2 grid steps (v7x dual-TC sharding), 8-row aligned,
      capped at tile_b (VMEM-limited maximum).
    """
    if B <= 16:
        return B
    half = -(-B // 2)                       # ceil(B / 2)
    tb = min(tile_b, ((half + 7) // 8) * 8)
    return max(8, tb)


def linear_clamp(x, w, b, min_value, max_value, *, tile_b=8192):
    """x: (B, IN) f32, w: (IN, OUT) f32, b: (OUT,) f32 -> (B, OUT) f32."""
    B, IN = x.shape
    OUT = w.shape[1]
    b2 = b.reshape(1, OUT)

    tb = _choose_tile(B, tile_b)
    grid = pl.cdiv(B, tb)  # ragged last tile handled by Pallas store masking

    bounds = jnp.asarray([min_value, max_value], dtype=jnp.float32)

    return pl.pallas_call(
        _linear_clamp_kernel,
        out_shape=jax.ShapeDtypeStruct((B, OUT), x.dtype),
        grid_spec=pl.GridSpec(
            grid=(grid,),
            in_specs=[
                # Runtime clamp bounds live in SMEM (no recompile on change).
                pl.BlockSpec(memory_space=pltpu.MemorySpace.SMEM),
                # Batch tile of x, indexed along the grid.
                pl.BlockSpec((tb, IN), lambda i: (i, 0)),
                # Weights / bias: constant index_map -> resident in VMEM.
                pl.BlockSpec((IN, OUT), lambda i: (0, 0)),
                pl.BlockSpec((1, OUT), lambda i: (0, 0)),
            ],
            out_specs=pl.BlockSpec((tb, OUT), lambda i: (i, 0)),
        ),
        compiler_params=pltpu.CompilerParams(
            dimension_semantics=("parallel",),
            # ~16 MiB double-buffered x+out at tb=8192 (lane-padded to 128)
            # plus headroom; safe on v5e/v6e/v7x.
            vmem_limit_bytes=32 * 1024 * 1024,
        ),
    )(bounds, x, w, b2)


if __name__ == "__main__":
    key = jax.random.PRNGKey(0)
    k_x, k_w, k_b, k_xb = jax.random.split(key, 4)

    IN, OUT = 5, 10
    min_value, max_value = -0.5, 0.5

    # Synthetic nn.Linear(5, 10) parameters.  PyTorch weight is (OUT, IN);
    # generate in that layout then transpose so the kernel computes x @ W + b.
    w_torch_layout = jax.random.normal(k_w, (OUT, IN), dtype=jnp.float32) * 0.1
    w = jnp.transpose(w_torch_layout)                      # (IN, OUT)
    b = jax.random.normal(k_b, (OUT,), dtype=jnp.float32) * 0.1

    # Spec-shaped input (matches x1 = torch.randn(1, 5)): single full block.
    x1 = jax.random.normal(k_x, (1, IN), dtype=jnp.float32)
    out1 = jax.block_until_ready(linear_clamp(x1, w, b, min_value, max_value))
    ref1 = jnp.clip(x1 @ w + b[None, :], min_value, max_value)
    assert out1.shape == (1, OUT)
    assert jnp.allclose(out1, ref1, atol=1e-5), "mismatch vs reference (B=1)"

    # Multi-tile path exercising 2 grid steps + ragged last tile (300 rows ->
    # tb=152, grid=2, last tile only 148 valid rows, store-masked in Pallas).
    xb = jax.random.normal(k_xb, (300, IN), dtype=jnp.float32)
    outb = jax.block_until_ready(linear_clamp(xb, w, b, min_value, max_value))
    refb = jnp.clip(xb @ w + b[None, :], min_value, max_value)
    assert outb.shape == (300, OUT)
    assert jnp.allclose(outb, refb, atol=1e-5), "mismatch vs reference (B=300)"

    print("KERNEL_OK")
</pallas_src>

<mosaic_0001>
module attributes {stable_mosaic.version = 11 : i64} {
  func.func @_linear_clamp_kernel(%arg0: i32, %arg1: memref<2xf32, #tpu.memory_space<smem>>, %arg2: memref<1x5xf32, #tpu.memory_space<vmem>>, %arg3: memref<5x10xf32, #tpu.memory_space<vmem>>, %arg4: memref<1x10xf32, #tpu.memory_space<vmem>>, %arg5: memref<1x10xf32, #tpu.memory_space<vmem>>) attributes {dimension_semantics = [#tpu.dimension_semantics<parallel>], iteration_bounds = array<i64: 1>, scalar_prefetch = 0 : i64, scratch_operands = 0 : i64, tpu.core_type = #tpu.core_type<tc>, window_params = [{transform_indices = @transform_0, window_bounds = array<i64: 2>}, {transform_indices = @transform_1, window_bounds = array<i64: 1, 5>}, {pipeline_mode = #tpu.pipeline_mode<synchronous>, transform_indices = @transform_2, window_bounds = array<i64: 5, 10>}, {pipeline_mode = #tpu.pipeline_mode<synchronous>, transform_indices = @transform_3, window_bounds = array<i64: 1, 10>}, {transform_indices = @transform_4, window_bounds = array<i64: 1, 10>}]} {
    %c0 = arith.constant 0 : index
    %c0_0 = arith.constant 0 : index
    %0 = vector.load %arg2[%c0, %c0_0] : memref<1x5xf32, #tpu.memory_space<vmem>>, vector<1x5xf32>
    %c0_1 = arith.constant 0 : index
    %c0_2 = arith.constant 0 : index
    %1 = vector.load %arg3[%c0_1, %c0_2] : memref<5x10xf32, #tpu.memory_space<vmem>>, vector<5x10xf32>
    %cst = arith.constant dense<0.000000e+00> : vector<1x10xf32>
    %2 = tpu.matmul %0, %1, %cst {dimension_numbers = #tpu.dot_dimension_numbers<[1], [0], [0], [1], [0, 0, 1, 1], [], []>} : vector<1x5xf32>, vector<5x10xf32>, vector<1x10xf32> -> vector<1x10xf32>
    %c0_3 = arith.constant 0 : index
    %c0_4 = arith.constant 0 : index
    %3 = vector.load %arg4[%c0_3, %c0_4] : memref<1x10xf32, #tpu.memory_space<vmem>>, vector<1x10xf32>
    %4 = arith.addf %2, %3 : vector<1x10xf32>
    %c0_5 = arith.constant 0 : index
    %5 = memref.load %arg1[%c0_5] : memref<2xf32, #tpu.memory_space<smem>>
    %c1 = arith.constant 1 : index
    %6 = memref.load %arg1[%c1] : memref<2xf32, #tpu.memory_space<smem>>
    %7 = vector.broadcast %5 : f32 to vector<1x10xf32>
    %8 = arith.maximumf %7, %4 : vector<1x10xf32>
    %9 = vector.broadcast %6 : f32 to vector<1x10xf32>
    %10 = arith.minimumf %9, %8 : vector<1x10xf32>
    %c0_6 = arith.constant 0 : index
    %c0_7 = arith.constant 0 : index
    %11 = vector.load %arg5[%c0_6, %c0_7] : memref<1x10xf32, #tpu.memory_space<vmem>>, vector<1x10xf32>
    tpu.vector_store %arg5[%c0_6, %c0_7], %10 {strides = array<i32>} : memref<1x10xf32, #tpu.memory_space<vmem>>, vector<1x10xf32>,
    return
  }
  func.func @transform_0(%arg0: i32) -> i32 {
    %c0_i32 = arith.constant 0 : i32
    %c0_i32_0 = arith.constant 0 : i32
    return %c0_i32 : i32
  }
  func.func @transform_1(%arg0: i32) -> (i32, i32) {
    %c0_i32 = arith.constant 0 : i32
    %c0_i32_0 = arith.constant 0 : i32
    return %arg0, %c0_i32 : i32, i32
  }
  func.func @transform_2(%arg0: i32) -> (i32, i32) {
    %c0_i32 = arith.constant 0 : i32
    %c0_i32_0 = arith.constant 0 : i32
    %c0_i32_1 = arith.constant 0 : i32
    return %c0_i32, %c0_i32_0 : i32, i32
  }
  func.func @transform_3(%arg0: i32) -> (i32, i32) {
    %c0_i32 = arith.constant 0 : i32
    %c0_i32_0 = arith.constant 0 : i32
    %c0_i32_1 = arith.constant 0 : i32
    return %c0_i32, %c0_i32_0 : i32, i32
  }
  func.func @transform_4(%arg0: i32) -> (i32, i32) {
    %c0_i32 = arith.constant 0 : i32
    %c0_i32_0 = arith.constant 0 : i32
    return %arg0, %c0_i32 : i32, i32
  }
}

</mosaic_0001>

<llo_original>
// kernel: tpu_custom_call.1
$region0: #{tpu_custom_call.1}
  #allocation0 [shape = 'u32[]', space=smem, size = 0x4, offset = 0x4, fixed_abs, tag = 'smem constant byte address 0x4 - core index']
  #allocation1 [shape = 'u32[72,128]{1,0:T(1,128)}', space=vmem, size = 0x9000, scoped, tag = 'internal scratch']
  %s0 = inlined_call_operand.hbm [shape: f32[2], index: 0, kind: input, shape index: {}]
  %s1 = inlined_call_operand.hbm [shape: f32[1,5], index: 1, kind: input, shape index: {}]
  %s2 = inlined_call_operand.hbm [shape: f32[5,10], index: 2, kind: input, shape index: {}]
  %s3 = inlined_call_operand.vmem [shape: f32[1,10], index: 3, kind: input, shape index: {}]
  %s4 = inlined_call_operand.hbm [shape: f32[1,10], index: 4, kind: output, shape index: {}]
  %s5 = sld [smem:[#allocation0]]
  $region38: #{tpu_custom_call.1} parent=0
    _
  %s7 = ssub.s32 1, %s5
  %s8 = scalar_select 0, %s7, %s5
  $region1: #{tpu_custom_call.1} parent=0
    #allocation2 [shape = 'u8[512]{0}', space=smem, size = 0x200, scoped, tag = 'input window, operand 0, single buffered']
    #allocation3 [shape = 's32[1]{0}', space=sflag, size = 0x4, scoped, tag = 'scoped memory for tpu_custom_call.1']
    #allocation4 [shape = 's32[1]{0}', space=sflag, size = 0x4, scoped, tag = 'scoped memory for tpu_custom_call.1']
    #allocation5 [shape = 's32[1]{0}', space=sflag, size = 0x4, scoped, tag = 'scoped memory for tpu_custom_call.1']
    #allocation6 [shape = 'u8[512]{0}', space=vmem, size = 0x400, scoped, tag = 'input window, operand 1, single buffered']
    #allocation7 [shape = 'u8[4096]{0}', space=vmem, size = 0x1000, scoped, tag = 'input window, operand 2, single buffered']
    #allocation8 [shape = 's32[1]{0}', space=sflag, size = 0x4, scoped, tag = 'scoped memory for tpu_custom_call.1']
    #allocation9 [shape = 'u8[512]{0}', space=vmem, size = 0x400, scoped, tag = 'output window, operand 0, single buffered']
    %9 = vsyncpa [#allocation5], 0
    %10 = vsyncpa [#allocation3], 0
    %11 = vsyncpa [#allocation8], 0
    %12 = vsyncpa [#allocation4], 0
    // Predicated region
    $region2: #{tpu_custom_call.1} parent=1 // pred_check
      _
    $region3: #{tpu_custom_call.1} parent=1 // pred_check_branch
      %14 = sbr.rel (0) target = $region5
    $region4: #{tpu_custom_call.1} parent=1 // pred_region
      %16 = vsyncadd [#allocation5], 0
      %s18 = sshll.u32 %s0, 4
      %s19 = int_to_ptr.hbm [resolvable:$true] %s18
      %21 = dma.hbm_to_smem %s19, 16, [#allocation2], [#allocation5]
    $region5: #{tpu_custom_call.1} parent=1 // pred_fallthru
      _
    // Predicated region
    $region6: #{tpu_custom_call.1} parent=1 // pred_check
      _
    $region7: #{tpu_custom_call.1} parent=1 // pred_check_branch
      %23 = sbr.rel (0) target = $region9
    $region8: #{tpu_custom_call.1} parent=1 // pred_region
      %25 = vsyncadd [#allocation3], 0
      %s27 = sshll.u32 %s1, 4
      %s28 = int_to_ptr.hbm [resolvable:$true] %s27
      %s29 = sshll.u32 [#allocation6], 4
      %s30 = int_to_ptr.vmem [resolvable:$true] %s29
      %32 = dma.hbm_to_vmem [thread:$0]  %s28, 16, %s30, [#allocation3]
    $region9: #{tpu_custom_call.1} parent=1 // pred_fallthru
      _
    // Predicated region
    $region10: #{tpu_custom_call.1} parent=1 // pred_check
      _
    $region11: #{tpu_custom_call.1} parent=1 // pred_check_branch
      %34 = sbr.rel (0) target = $region13
    $region12: #{tpu_custom_call.1} parent=1 // pred_region
      %36 = vsyncadd [#allocation8], 0
      %s38 = sshll.u32 %s2, 4
      %s39 = int_to_ptr.hbm [resolvable:$true] %s38
      %s40 = sshll.u32 [#allocation7], 4
      %s41 = int_to_ptr.vmem [resolvable:$true] %s40
      %43 = dma.hbm_to_vmem [thread:$0]  %s39, 128, %s41, [#allocation8]
    $region13: #{tpu_custom_call.1} parent=1 // pred_fallthru
      _
    // Predicated region
    $region14: #{tpu_custom_call.1} parent=1 // pred_check
      _
    $region15: #{tpu_custom_call.1} parent=1 // pred_check_branch
      %45 = sbr.rel (0) target = $region17
    $region16: #{tpu_custom_call.1} parent=1 // pred_region
      _
    $region17: #{tpu_custom_call.1} parent=1 // pred_fallthru
      _
    // Predicated region
    $region18: #{tpu_custom_call.1} parent=1 // pred_check
      _
    $region19: #{tpu_custom_call.1} parent=1 // pred_check_branch
      %47 = sbr.rel (0) target = $region21
    $region20: #{tpu_custom_call.1} parent=1 // pred_region
      %49 = dma.done [#allocation5], 16
    $region21: #{tpu_custom_call.1} parent=1 // pred_fallthru
      _
    // Predicated region
    $region22: #{tpu_custom_call.1} parent=1 // pred_check
      _
    $region23: #{tpu_custom_call.1} parent=1 // pred_check_branch
      %51 = sbr.rel (0) target = $region25
    $region24: #{tpu_custom_call.1} parent=1 // pred_region
      %53 = dma.done [#allocation3], 16
    $region25: #{tpu_custom_call.1} parent=1 // pred_fallthru
      _
    // Predicated region
    $region26: #{tpu_custom_call.1} parent=1 // pred_check
      _
    $region27: #{tpu_custom_call.1} parent=1 // pred_check_branch
      %55 = sbr.rel (0) target = $region29
    $region28: #{tpu_custom_call.1} parent=1 // pred_region
      %57 = dma.done [#allocation8], 128
    $region29: #{tpu_custom_call.1} parent=1 // pred_fallthru
      _
    %58 = sfence
    %v59 = vld [vmem:[#allocation6] sm:$0x1]
    %v60 = vld [vmem:[#allocation7] sm:$0x1f]
    %v61 = vld [vmem:[%s3] sm:$0x1]
    %vm62 = vcmask 39936
    %v64 = vsel %vm62, %v59, 0
    %vm66 = vcmask 1044480
    %v68 = vsel %vm66, %v60, 0
    %70 = vmatpush.msra.mxu0 0.0
    %71 = vmatpush.msra.mxu0 0.0
    %72 = vmatpush.msra.mxu0 0.0
    %73 = vmatpush.msra.mxu0 0.0
    %74 = vmatpush.msra.mxu0 0.0
    %75 = vmatpush.msra.mxu0 0.0
    %76 = vmatpush.msra.mxu0 0.0
    %77 = vmatpush.msra.mxu0 0.0
    %78 = vmatpush.msra.mxu0 0.0
    %79 = vmatpush.msra.mxu0 0.0
    %80 = vmatpush.msra.mxu0 0.0
    %81 = vmatpush.msra.mxu0 0.0
    %82 = vmatpush.msra.mxu0 0.0
    %83 = vmatpush.msra.mxu0 0.0
    %84 = vmatpush.msra.mxu0 0.0
    %85 = vmatpush.msra.mxu0 %v68
    %86 = vmatmul.f32.gmra.mxu0 %v64
    %v87 = vpop.f32.mrf.mxu0
    %v88 = vadd.f32 %v61, %v87
    %89 = vdwg.mxu0
    %s90 = sld [smem:[#allocation2]]
    %s91 = sld [smem:[#allocation2 + $0x1]]
    %v92 = vstv %s90
    %v93 = vmax.f32 %v92, %v88
    %v94 = vstv %s91
    %v95 = vmin.f32 %v94, %v93
    %vm96 = vcmask 73728
    %97 = vst.msk [vmem:[#allocation9] sm:$0x1] %vm96, %v95
    // Predicated region
    $region30: #{tpu_custom_call.1} parent=1 // pred_check
      _
    $region31: #{tpu_custom_call.1} parent=1 // pred_check_branch
      %99 = sbr.rel (0) target = $region33
    $region32: #{tpu_custom_call.1} parent=1 // pred_region
      %101 = vsyncadd [#allocation4], 0
      %s103 = sshll.u32 [#allocation9], 4
      %s104 = int_to_ptr.vmem [resolvable:$true] %s103
      %s105 = sshll.u32 %s4, 4
      %s106 = int_to_ptr.hbm [resolvable:$true] %s105
      %108 = dma.vmem_to_hbm [thread:$0]  %s104, 16, %s106, [#allocation4]
    $region33: #{tpu_custom_call.1} parent=1 // pred_fallthru
      _
    // Predicated region
    $region34: #{tpu_custom_call.1} parent=1 // pred_check
      _
    $region35: #{tpu_custom_call.1} parent=1 // pred_check_branch
      %110 = sbr.rel (0) target = $region37
    $region36: #{tpu_custom_call.1} parent=1 // pred_region
      %112 = dma.done [#allocation4], 16
    $region37: #{tpu_custom_call.1} parent=1 // pred_fallthru
      _
    %113 = vsyncpa [#allocation3], 1
    %114 = vsyncpa [#allocation8], 1
    %115 = vsyncpa [#allocation4], 1
    %116 = vsyncpa [#allocation5], 1

</llo_original>
